<compile_context>
chip_gen: v7x
topology: tpu7x:2x2x1
jax: 0.10.0
libtpu: 0.0.40
codegen_flags: <defaults>
</compile_context>

<pallas_src>
import jax
import jax.numpy as jnp
from jax.experimental import pallas as pl
from jax.experimental.pallas import tpu as pltpu

LANES = 128  # lane-dense padded width of the final layer / output


def _round_up(n, m):
    return ((n + m - 1) // m) * m


def siamese_kernel(x_ref, w1_ref, b1_ref, w2_ref, b2_ref, w3_ref, b3_ref, o_ref):
    # bf16 operands on the MXU, f32 accumulation, f32 activations on VPU/EUP.
    x = x_ref[...]                                                       # (TM, E) bf16
    h1 = jnp.dot(x, w1_ref[...], preferred_element_type=jnp.float32) + b1_ref[...]
    h1 = jnp.maximum(h1, 0.0).astype(jnp.bfloat16)                       # ReLU -> bf16
    h2 = jnp.dot(h1, w2_ref[...], preferred_element_type=jnp.float32) + b2_ref[...]
    h2 = jnp.maximum(h2, 0.0).astype(jnp.bfloat16)                       # ReLU -> bf16
    z = jnp.dot(h2, w3_ref[...], preferred_element_type=jnp.float32) + b3_ref[...]
    o_ref[...] = jax.nn.sigmoid(z).astype(o_ref.dtype)                   # (TM, 128) f32


def _vmem_limit_bytes(tm, e, h1, h2, lanes):
    # Resident weights (bf16) + f32 biases.
    weight_bytes = (e * h1 + h1 * h2 + h2 * lanes) * 2 + (h1 + h2 + lanes) * 4
    # Double-buffered streamed input (bf16) and output (f32) tiles.
    stream_bytes = 2 * (tm * e * 2) + 2 * (tm * lanes * 4)
    # In-kernel f32 intermediates (h1, h2, z).
    scratch_bytes = tm * (h1 + h2 + lanes) * 4
    total = weight_bytes + stream_bytes + scratch_bytes
    return max(int(total * 1.5) + (2 << 20), 4 << 20)


def siamese_forward(x, w1, b1, w2, b2, w3, b3, *, tm=512):
    """x: (B, E) float32. Weights are (in, out); biases are (1, out). Returns (B, 1) f32.

    tm: batch tile size (rows per grid step). Default 512 amortizes the ~0.35 us/step
    pipeline overhead while keeping the per-core footprint far below v7x's 64 MiB VMEM.
    """
    B, E = x.shape
    H1 = w1.shape[1]
    H2 = w2.shape[1]

    # Clamp the tile for small batches; tile (and padded batch) must be a multiple of 8.
    tm = max(8, min(tm, _round_up(B, 8)))
    b_pad = _round_up(B, tm)
    grid = (pl.cdiv(b_pad, tm),)

    # bf16 operands for the MXU / halved HBM traffic on the x stream.
    x_p = jnp.zeros((b_pad, E), jnp.bfloat16).at[:B].set(x.astype(jnp.bfloat16))
    w1_b = w1.astype(jnp.bfloat16)
    w2_b = w2.astype(jnp.bfloat16)
    # Lane-dense final layer: pad (H2, 1) -> (H2, LANES), bias (1, 1) -> (1, LANES).
    w3_b = jnp.zeros((H2, LANES), jnp.bfloat16).at[:, :1].set(w3.astype(jnp.bfloat16))
    b3_p = jnp.zeros((1, LANES), jnp.float32).at[:, :1].set(b3.astype(jnp.float32))
    b1_f = b1.astype(jnp.float32)
    b2_f = b2.astype(jnp.float32)

    resident = lambda shape: pl.BlockSpec(shape, lambda i: (0, 0))  # stays in VMEM

    out_padded = pl.pallas_call(
        siamese_kernel,
        out_shape=jax.ShapeDtypeStruct((b_pad, LANES), jnp.float32),
        grid=grid,
        in_specs=[
            pl.BlockSpec((tm, E), lambda i: (i, 0)),   # x: streamed per batch tile
            resident((E, H1)),                         # W1
            resident((1, H1)),                         # b1
            resident((H1, H2)),                        # W2
            resident((1, H2)),                         # b2
            resident((H2, LANES)),                     # W3 (lane-padded)
            resident((1, LANES)),                      # b3 (lane-padded)
        ],
        out_specs=pl.BlockSpec((tm, LANES), lambda i: (i, 0)),
        compiler_params=pltpu.CompilerParams(
            dimension_semantics=("parallel",),
            vmem_limit_bytes=_vmem_limit_bytes(tm, E, H1, H2, LANES),
        ),
    )(x_p, w1_b, b1_f, w2_b, b2_f, w3_b, b3_p)

    # Real rows, real logit column (padded columns hold sigmoid(0) = 0.5 — discarded).
    return out_padded[:B, :1]


def init_linear_params(key, in_features, out_features):
    """Deterministic init mimicking torch.nn.Linear default (uniform +/- 1/sqrt(in)).
    Returns W as (in, out) (already transposed vs. PyTorch's (out, in)) and b as (1, out)."""
    kw, kb = jax.random.split(key)
    bound = 1.0 / jnp.sqrt(jnp.float32(in_features))
    w = jax.random.uniform(kw, (in_features, out_features), jnp.float32, -bound, bound)
    b = jax.random.uniform(kb, (1, out_features), jnp.float32, -bound, bound)
    return w, b


if __name__ == "__main__":
    key = jax.random.PRNGKey(0)
    k_x, k1, k2, k3 = jax.random.split(key, 4)

    batch = 20            # not a multiple of the tile -> exercises batch padding
    embedding_dim = 32
    tile_m = 8            # small tile so the toy run exercises a multi-step grid

    x = jax.random.normal(k_x, (batch, embedding_dim), jnp.float32)

    w1, b1 = init_linear_params(k1, embedding_dim, 128)  # fc1
    w2, b2 = init_linear_params(k2, 128, 64)             # fc2
    w3, b3 = init_linear_params(k3, 64, 1)               # fc3

    out = siamese_forward(x, w1, b1, w2, b2, w3, b3, tm=tile_m)
    out = jax.block_until_ready(out)

    # Reference following the same bf16-operand / f32-accumulate path.
    bf = jnp.bfloat16
    h1 = jnp.maximum(
        jnp.dot(x.astype(bf), w1.astype(bf), preferred_element_type=jnp.float32) + b1, 0.0
    )
    h2 = jnp.maximum(
        jnp.dot(h1.astype(bf), w2.astype(bf), preferred_element_type=jnp.float32) + b2, 0.0
    )
    ref = jax.nn.sigmoid(
        jnp.dot(h2.astype(bf), w3.astype(bf), preferred_element_type=jnp.float32) + b3
    )

    # Full-precision reference (original module semantics) for a coarser sanity check.
    ref_f32 = jax.nn.sigmoid(
        jnp.maximum(jnp.maximum(x @ w1 + b1, 0.0) @ w2 + b2, 0.0) @ w3 + b3
    )

    assert out.shape == (batch, 1), out.shape
    assert jnp.allclose(out, ref, atol=1e-2, rtol=1e-2), (out, ref)
    assert jnp.allclose(out, ref_f32, atol=5e-2, rtol=5e-2), (out, ref_f32)
    print("KERNEL_OK")
</pallas_src>

<mosaic_0001>
module attributes {stable_mosaic.version = 11 : i64} {
  func.func @siamese_kernel(%arg0: i32, %arg1: memref<8x32xbf16, #tpu.memory_space<vmem>>, %arg2: memref<32x128xbf16, #tpu.memory_space<vmem>>, %arg3: memref<1x128xf32, #tpu.memory_space<vmem>>, %arg4: memref<128x64xbf16, #tpu.memory_space<vmem>>, %arg5: memref<1x64xf32, #tpu.memory_space<vmem>>, %arg6: memref<64x128xbf16, #tpu.memory_space<vmem>>, %arg7: memref<1x128xf32, #tpu.memory_space<vmem>>, %arg8: memref<8x128xf32, #tpu.memory_space<vmem>>) attributes {dimension_semantics = [#tpu.dimension_semantics<parallel>], iteration_bounds = array<i64: 3>, scalar_prefetch = 0 : i64, scratch_operands = 0 : i64, tpu.core_type = #tpu.core_type<tc>, window_params = [{transform_indices = @transform_0, window_bounds = array<i64: 8, 32>}, {pipeline_mode = #tpu.pipeline_mode<synchronous>, transform_indices = @transform_1, window_bounds = array<i64: 32, 128>}, {pipeline_mode = #tpu.pipeline_mode<synchronous>, transform_indices = @transform_2, window_bounds = array<i64: 1, 128>}, {pipeline_mode = #tpu.pipeline_mode<synchronous>, transform_indices = @transform_3, window_bounds = array<i64: 128, 64>}, {pipeline_mode = #tpu.pipeline_mode<synchronous>, transform_indices = @transform_4, window_bounds = array<i64: 1, 64>}, {pipeline_mode = #tpu.pipeline_mode<synchronous>, transform_indices = @transform_5, window_bounds = array<i64: 64, 128>}, {pipeline_mode = #tpu.pipeline_mode<synchronous>, transform_indices = @transform_6, window_bounds = array<i64: 1, 128>}, {transform_indices = @transform_7, window_bounds = array<i64: 8, 128>}]} {
    %c0 = arith.constant 0 : index
    %c0_0 = arith.constant 0 : index
    %0 = vector.load %arg1[%c0, %c0_0] : memref<8x32xbf16, #tpu.memory_space<vmem>>, vector<8x32xbf16>
    %c0_1 = arith.constant 0 : index
    %c0_2 = arith.constant 0 : index
    %1 = vector.load %arg2[%c0_1, %c0_2] : memref<32x128xbf16, #tpu.memory_space<vmem>>, vector<32x128xbf16>
    %cst = arith.constant dense<0.000000e+00> : vector<8x128xf32>
    %2 = tpu.matmul %0, %1, %cst {dimension_numbers = #tpu.dot_dimension_numbers<[1], [0], [0], [1], [0, 0, 1, 1], [], []>} : vector<8x32xbf16>, vector<32x128xbf16>, vector<8x128xf32> -> vector<8x128xf32>
    %c0_3 = arith.constant 0 : index
    %c0_4 = arith.constant 0 : index
    %3 = vector.load %arg3[%c0_3, %c0_4] : memref<1x128xf32, #tpu.memory_space<vmem>>, vector<1x128xf32>
    %4 = vector.broadcast %3 : vector<1x128xf32> to vector<8x128xf32>
    %5 = arith.addf %2, %4 : vector<8x128xf32>
    %cst_5 = arith.constant 0.000000e+00 : f32
    %6 = vector.broadcast %cst_5 : f32 to vector<8x128xf32>
    %7 = arith.maximumf %5, %6 : vector<8x128xf32>
    %8 = arith.truncf %7 : vector<8x128xf32> to vector<8x128xbf16>
    %c0_6 = arith.constant 0 : index
    %c0_7 = arith.constant 0 : index
    %9 = vector.load %arg4[%c0_6, %c0_7] : memref<128x64xbf16, #tpu.memory_space<vmem>>, vector<128x64xbf16>
    %cst_8 = arith.constant dense<0.000000e+00> : vector<8x64xf32>
    %10 = tpu.matmul %8, %9, %cst_8 {dimension_numbers = #tpu.dot_dimension_numbers<[1], [0], [0], [1], [0, 0, 1, 1], [], []>} : vector<8x128xbf16>, vector<128x64xbf16>, vector<8x64xf32> -> vector<8x64xf32>
    %c0_9 = arith.constant 0 : index
    %c0_10 = arith.constant 0 : index
    %11 = vector.load %arg5[%c0_9, %c0_10] : memref<1x64xf32, #tpu.memory_space<vmem>>, vector<1x64xf32>
    %12 = vector.broadcast %11 : vector<1x64xf32> to vector<8x64xf32>
    %13 = arith.addf %10, %12 : vector<8x64xf32>
    %cst_11 = arith.constant 0.000000e+00 : f32
    %14 = vector.broadcast %cst_11 : f32 to vector<8x64xf32>
    %15 = arith.maximumf %13, %14 : vector<8x64xf32>
    %16 = arith.truncf %15 : vector<8x64xf32> to vector<8x64xbf16>
    %c0_12 = arith.constant 0 : index
    %c0_13 = arith.constant 0 : index
    %17 = vector.load %arg6[%c0_12, %c0_13] : memref<64x128xbf16, #tpu.memory_space<vmem>>, vector<64x128xbf16>
    %cst_14 = arith.constant dense<0.000000e+00> : vector<8x128xf32>
    %18 = tpu.matmul %16, %17, %cst_14 {dimension_numbers = #tpu.dot_dimension_numbers<[1], [0], [0], [1], [0, 0, 1, 1], [], []>} : vector<8x64xbf16>, vector<64x128xbf16>, vector<8x128xf32> -> vector<8x128xf32>
    %c0_15 = arith.constant 0 : index
    %c0_16 = arith.constant 0 : index
    %19 = vector.load %arg7[%c0_15, %c0_16] : memref<1x128xf32, #tpu.memory_space<vmem>>, vector<1x128xf32>
    %20 = vector.broadcast %19 : vector<1x128xf32> to vector<8x128xf32>
    %21 = arith.addf %18, %20 : vector<8x128xf32>
    %22 = arith.negf %21 : vector<8x128xf32>
    %23 = math.exp %22 : vector<8x128xf32>
    %cst_17 = arith.constant 1.000000e+00 : f32
    %24 = vector.broadcast %cst_17 : f32 to vector<8x128xf32>
    %25 = arith.addf %24, %23 : vector<8x128xf32>
    %26 = arith.divf %24, %25 : vector<8x128xf32>
    %c0_18 = arith.constant 0 : index
    %c0_19 = arith.constant 0 : index
    %27 = vector.load %arg8[%c0_18, %c0_19] : memref<8x128xf32, #tpu.memory_space<vmem>>, vector<8x128xf32>
    tpu.vector_store %arg8[%c0_18, %c0_19], %26 {strides = array<i32>} : memref<8x128xf32, #tpu.memory_space<vmem>>, vector<8x128xf32>,
    return
  }
  func.func @transform_0(%arg0: i32) -> (i32, i32) {
    %c0_i32 = arith.constant 0 : i32
    %c0_i32_0 = arith.constant 0 : i32
    return %arg0, %c0_i32 : i32, i32
  }
  func.func @transform_1(%arg0: i32) -> (i32, i32) {
    %c0_i32 = arith.constant 0 : i32
    %c0_i32_0 = arith.constant 0 : i32
    %c0_i32_1 = arith.constant 0 : i32
    return %c0_i32, %c0_i32_0 : i32, i32
  }
  func.func @transform_2(%arg0: i32) -> (i32, i32) {
    %c0_i32 = arith.constant 0 : i32
    %c0_i32_0 = arith.constant 0 : i32
    %c0_i32_1 = arith.constant 0 : i32
    return %c0_i32, %c0_i32_0 : i32, i32
  }
  func.func @transform_3(%arg0: i32) -> (i32, i32) {
    %c0_i32 = arith.constant 0 : i32
    %c0_i32_0 = arith.constant 0 : i32
    %c0_i32_1 = arith.constant 0 : i32
    return %c0_i32, %c0_i32_0 : i32, i32
  }
  func.func @transform_4(%arg0: i32) -> (i32, i32) {
    %c0_i32 = arith.constant 0 : i32
    %c0_i32_0 = arith.constant 0 : i32
    %c0_i32_1 = arith.constant 0 : i32
    return %c0_i32, %c0_i32_0 : i32, i32
  }
  func.func @transform_5(%arg0: i32) -> (i32, i32) {
    %c0_i32 = arith.constant 0 : i32
    %c0_i32_0 = arith.constant 0 : i32
    %c0_i32_1 = arith.constant 0 : i32
    return %c0_i32, %c0_i32_0 : i32, i32
  }
  func.func @transform_6(%arg0: i32) -> (i32, i32) {
    %c0_i32 = arith.constant 0 : i32
    %c0_i32_0 = arith.constant 0 : i32
    %c0_i32_1 = arith.constant 0 : i32
    return %c0_i32, %c0_i32_0 : i32, i32
  }
  func.func @transform_7(%arg0: i32) -> (i32, i32) {
    %c0_i32 = arith.constant 0 : i32
    %c0_i32_0 = arith.constant 0 : i32
    return %arg0, %c0_i32 : i32, i32
  }
}

</mosaic_0001>

<llo_original>
// kernel: tpu_custom_call.1
$region0: #{tpu_custom_call.1}
  #allocation0 [shape = 'u32[]', space=smem, size = 0x4, offset = 0x4, fixed_abs, tag = 'smem constant byte address 0x4 - core index']
  #allocation1 [shape = 'u32[144,128]{1,0:T(1,128)}', space=vmem, size = 0x12000, scoped, tag = 'internal scratch']
  %s0 = inlined_call_operand.vmem [shape: bf16[24,32], index: 0, kind: input, shape index: {}]
  %s1 = inlined_call_operand.vmem [shape: bf16[32,128], index: 1, kind: input, shape index: {}]
  %s2 = inlined_call_operand.vmem [shape: f32[1,128], index: 2, kind: input, shape index: {}]
  %s3 = inlined_call_operand.vmem [shape: bf16[128,64], index: 3, kind: input, shape index: {}]
  %s4 = inlined_call_operand.vmem [shape: f32[1,64], index: 4, kind: input, shape index: {}]
  %s5 = inlined_call_operand.vmem [shape: bf16[64,128], index: 5, kind: input, shape index: {}]
  %s6 = inlined_call_operand.vmem [shape: f32[1,128], index: 6, kind: input, shape index: {}]
  %s7 = inlined_call_operand.hbm [shape: f32[24,128], index: 7, kind: output, shape index: {}]
  %s8 = sld [smem:[#allocation0]]
  $region61: #{tpu_custom_call.1} parent=0
    _
  %s10 = ssub.s32 1, %s8
  %s11 = scalar_select 0, %s10, %s8
  $region1: #{tpu_custom_call.1} parent=0
    #allocation2 [shape = 'u8[8192]{0}', space=vmem, size = 0x2000, scoped, tag = 'output window, operand 0']
    #allocation3 [shape = 's32[2]{0}', space=sflag, size = 0x8, scoped, tag = 'scoped memory for tpu_custom_call.1']
    %12 = vsyncpa [#allocation3], 0
    %s13 = scalar_lea.sflag [#allocation3], 1
    %14 = vsyncpa %s13, 0
    loop: start=0, step=1, limit=5
    $region2: #{tpu_custom_call.1} parent=1 // loop_pre_header
      _
    $region3: #{tpu_custom_call.1} parent=1 // loop_header
      %s16 = sphi 0, %s20
      %p17 = scmp.ge.s32.totalorder %s16, 5
      %s26 = sphi 0, %s28
      %s29 = sphi 0, %s26
      %s30 = sphi 0, %s29
      %s46 = sphi 0, %s30
      %s50 = sphi 0, %s50
      %s52 = sphi 0, %s50
      %s53 = sphi 0, %s52
      %s67 = sphi 0, %s53
      %s71 = sphi 0, %s71
      %s73 = sphi 0, %s71
      %s74 = sphi 0, %s73
      %s88 = sphi 0, %s74
      %s92 = sphi 0, %s92
      %s94 = sphi 0, %s92
      %s95 = sphi 0, %s94
      %s109 = sphi 0, %s95
      %s113 = sphi 0, %s113
      %s115 = sphi 0, %s113
      %s116 = sphi 0, %s115
      %s130 = sphi 0, %s116
      %s134 = sphi 0, %s134
      %s136 = sphi 0, %s134
      %s137 = sphi 0, %s136
      %s151 = sphi 0, %s137
      %s155 = sphi 0, %s155
      %s157 = sphi 0, %s155
      %s158 = sphi 0, %s157
      %s172 = sphi 0, %s158
      %s178 = sphi 0, %s180
      %s181 = sphi 0, %s178
      %s182 = sphi 0, %s181
      %s198 = sphi 0, %s182
    $region4: #{tpu_custom_call.1} parent=1 // loop_header_branch
      %19 = sbr.rel (%p17) target = $region8
    $region5: #{tpu_custom_call.1} parent=1 // loop_body
      %s21 = ssub.s32 %s16, 1
      %s22 = ssub.s32 %s16, 2
      %s23 = sadd.s32 %s16, 1
      %s24 = ssub.s32 %s16, %s23
      %p25 = scmp.eq.s32.totalorder %s24, 0
      %s27 = sadd.s32 %s26, 1
      %s28 = scalar_select %p25, %s26, %s27
      %p31 = pneg %p25
      %p32 = scmp.eq.s32.totalorder %s16, 2
      %p33 = por %p31, %p32
      %p34 = scmp.ne.s32.totalorder %s26, %s29
      %p35 = scmp.eq.s32.totalorder %s16, 0
      %p36 = por %p34, %p35
      %p37 = scmp.ne.s32.totalorder %s26, %s29
      %p38 = scmp.eq.s32.totalorder %s21, 2
      %p39 = por %p37, %p38
      %p40 = scmp.ne.s32.totalorder %s29, %s30
      %p41 = scmp.eq.s32.totalorder %s21, 0
      %p42 = por %p40, %p41
      %p43 = scmp.ne.s32.totalorder %s29, %s30
      %p44 = scmp.eq.s32.totalorder %s22, 2
      %p45 = por %p43, %p44
      %p47 = scmp.ne.s32.totalorder %s30, %s46
      %p48 = scmp.eq.s32.totalorder %s22, 0
      %p49 = por %p47, %p48
      %s51 = sadd.s32 %s50, 1
      %p54 = scmp.eq.s32.totalorder %s16, 2
      %p55 = scmp.ne.s32.totalorder %s50, %s52
      %p56 = scmp.eq.s32.totalorder %s16, 0
      %p57 = por %p55, %p56
      %p58 = scmp.ne.s32.totalorder %s50, %s52
      %p59 = scmp.eq.s32.totalorder %s21, 2
      %p60 = por %p58, %p59
      %p61 = scmp.ne.s32.totalorder %s52, %s53
      %p62 = scmp.eq.s32.totalorder %s21, 0
      %p63 = por %p61, %p62
      %p64 = scmp.ne.s32.totalorder %s52, %s53
      %p65 = scmp.eq.s32.totalorder %s22, 2
      %p66 = por %p64, %p65
      %p68 = scmp.ne.s32.totalorder %s53, %s67
      %p69 = scmp.eq.s32.totalorder %s22, 0
      %p70 = por %p68, %p69
      %s72 = sadd.s32 %s71, 1
      %p75 = scmp.eq.s32.totalorder %s16, 2
      %p76 = scmp.ne.s32.totalorder %s71, %s73
      %p77 = scmp.eq.s32.totalorder %s16, 0
      %p78 = por %p76, %p77
      %p79 = scmp.ne.s32.totalorder %s71, %s73
      %p80 = scmp.eq.s32.totalorder %s21, 2
      %p81 = por %p79, %p80
      %p82 = scmp.ne.s32.totalorder %s73, %s74
      %p83 = scmp.eq.s32.totalorder %s21, 0
      %p84 = por %p82, %p83
      %p85 = scmp.ne.s32.totalorder %s73, %s74
      %p86 = scmp.eq.s32.totalorder %s22, 2
      %p87 = por %p85, %p86
      %p89 = scmp.ne.s32.totalorder %s74, %s88
      %p90 = scmp.eq.s32.totalorder %s22, 0
      %p91 = por %p89, %p90
      %s93 = sadd.s32 %s92, 1
      %p96 = scmp.eq.s32.totalorder %s16, 2
      %p97 = scmp.ne.s32.totalorder %s92, %s94
      %p98 = scmp.eq.s32.totalorder %s16, 0
      %p99 = por %p97, %p98
      %p100 = scmp.ne.s32.totalorder %s92, %s94
      %p101 = scmp.eq.s32.totalorder %s21, 2
      %p102 = por %p100, %p101
      %p103 = scmp.ne.s32.totalorder %s94, %s95
      %p104 = scmp.eq.s32.totalorder %s21, 0
      %p105 = por %p103, %p104
      %p106 = scmp.ne.s32.totalorder %s94, %s95
      %p107 = scmp.eq.s32.totalorder %s22, 2
      %p108 = por %p106, %p107
      %p110 = scmp.ne.s32.totalorder %s95, %s109
      %p111 = scmp.eq.s32.totalorder %s22, 0
      %p112 = por %p110, %p111
      %s114 = sadd.s32 %s113, 1
      %p117 = scmp.eq.s32.totalorder %s16, 2
      %p118 = scmp.ne.s32.totalorder %s113, %s115
      %p119 = scmp.eq.s32.totalorder %s16, 0
      %p120 = por %p118, %p119
      %p121 = scmp.ne.s32.totalorder %s113, %s115
      %p122 = scmp.eq.s32.totalorder %s21, 2
      %p123 = por %p121, %p122
      %p124 = scmp.ne.s32.totalorder %s115, %s116
      %p125 = scmp.eq.s32.totalorder %s21, 0
      %p126 = por %p124, %p125
      %p127 = scmp.ne.s32.totalorder %s115, %s116
      %p128 = scmp.eq.s32.totalorder %s22, 2
      %p129 = por %p127, %p128
      %p131 = scmp.ne.s32.totalorder %s116, %s130
      %p132 = scmp.eq.s32.totalorder %s22, 0
      %p133 = por %p131, %p132
      %s135 = sadd.s32 %s134, 1
      %p138 = scmp.eq.s32.totalorder %s16, 2
      %p139 = scmp.ne.s32.totalorder %s134, %s136
      %p140 = scmp.eq.s32.totalorder %s16, 0
      %p141 = por %p139, %p140
      %p142 = scmp.ne.s32.totalorder %s134, %s136
      %p143 = scmp.eq.s32.totalorder %s21, 2
      %p144 = por %p142, %p143
      %p145 = scmp.ne.s32.totalorder %s136, %s137
      %p146 = scmp.eq.s32.totalorder %s21, 0
      %p147 = por %p145, %p146
      %p148 = scmp.ne.s32.totalorder %s136, %s137
      %p149 = scmp.eq.s32.totalorder %s22, 2
      %p150 = por %p148, %p149
      %p152 = scmp.ne.s32.totalorder %s137, %s151
      %p153 = scmp.eq.s32.totalorder %s22, 0
      %p154 = por %p152, %p153
      %s156 = sadd.s32 %s155, 1
      %p159 = scmp.eq.s32.totalorder %s16, 2
      %p160 = scmp.ne.s32.totalorder %s155, %s157
      %p161 = scmp.eq.s32.totalorder %s16, 0
      %p162 = por %p160, %p161
      %p163 = scmp.ne.s32.totalorder %s155, %s157
      %p164 = scmp.eq.s32.totalorder %s21, 2
      %p165 = por %p163, %p164
      %p166 = scmp.ne.s32.totalorder %s157, %s158
      %p167 = scmp.eq.s32.totalorder %s21, 0
      %p168 = por %p166, %p167
      %p169 = scmp.ne.s32.totalorder %s157, %s158
      %p170 = scmp.eq.s32.totalorder %s22, 2
      %p171 = por %p169, %p170
      %p173 = scmp.ne.s32.totalorder %s158, %s172
      %p174 = scmp.eq.s32.totalorder %s22, 0
      %p175 = por %p173, %p174
      %s176 = ssub.s32 %s16, %s23
      %p177 = scmp.eq.s32.totalorder %s176, 0
      %s179 = sadd.s32 %s178, 1
      %s180 = scalar_select %p177, %s178, %s179
      %p183 = pneg %p177
      %p184 = scmp.eq.s32.totalorder %s16, 2
      %p185 = por %p183, %p184
      %p186 = scmp.ne.s32.totalorder %s178, %s181
      %p187 = scmp.eq.s32.totalorder %s16, 0
      %p188 = por %p186, %p187
      %p189 = scmp.ne.s32.totalorder %s178, %s181
      %p190 = scmp.eq.s32.totalorder %s21, 2
      %p191 = por %p189, %p190
      %p192 = scmp.ne.s32.totalorder %s181, %s182
      %p193 = scmp.eq.s32.totalorder %s21, 0
      %p194 = por %p192, %p193
      %p195 = scmp.ne.s32.totalorder %s181, %s182
      %p196 = scmp.eq.s32.totalorder %s22, 2
      %p197 = por %p195, %p196
      %p199 = scmp.ne.s32.totalorder %s182, %s198
      %p200 = scmp.eq.s32.totalorder %s22, 0
      %p201 = por %p199, %p200
      %p202 = scmp.le.s32.totalorder 1, %s16
      %p203 = scmp.lt.s32.totalorder %s16, 4
      %p204 = pnand %p202, %p203
      %p205 = pneg %p204
      // Predicated region
      $region9: #{tpu_custom_call.1} parent=5 // pred_check
        _
      $region10: #{tpu_custom_call.1} parent=5 // pred_check_branch
        %207 = sbr.rel (%p204) target = $region12
      $region11: #{tpu_custom_call.1} parent=5 // pred_region
        %s208 = ssub.s32 %s16, 1
        // Predicated region
        $region13: #{tpu_custom_call.1} parent=11 // pred_check
          %p209 = pneg %p63
        $region14: #{tpu_custom_call.1} parent=11 // pred_check_branch
          %211 = sbr.rel (%p209) target = $region16
        $region15: #{tpu_custom_call.1} parent=11 // pred_region
          _
        $region16: #{tpu_custom_call.1} parent=11 // pred_fallthru
          _
        // Predicated region
        $region17: #{tpu_custom_call.1} parent=11 // pred_check
          %p212 = pneg %p84
        $region18: #{tpu_custom_call.1} parent=11 // pred_check_branch
          %214 = sbr.rel (%p212) target = $region20
        $region19: #{tpu_custom_call.1} parent=11 // pred_region
          _
        $region20: #{tpu_custom_call.1} parent=11 // pred_fallthru
          _
        // Predicated region
        $region21: #{tpu_custom_call.1} parent=11 // pred_check
          %p215 = pneg %p105
        $region22: #{tpu_custom_call.1} parent=11 // pred_check_branch
          %217 = sbr.rel (%p215) target = $region24
        $region23: #{tpu_custom_call.1} parent=11 // pred_region
          _
        $region24: #{tpu_custom_call.1} parent=11 // pred_fallthru
          _
        // Predicated region
        $region25: #{tpu_custom_call.1} parent=11 // pred_check
          %p218 = pneg %p126
        $region26: #{tpu_custom_call.1} parent=11 // pred_check_branch
          %220 = sbr.rel (%p218) target = $region28
        $region27: #{tpu_custom_call.1} parent=11 // pred_region
          _
        $region28: #{tpu_custom_call.1} parent=11 // pred_fallthru
          _
        // Predicated region
        $region29: #{tpu_custom_call.1} parent=11 // pred_check
          %p221 = pneg %p147
        $region30: #{tpu_custom_call.1} parent=11 // pred_check_branch
          %223 = sbr.rel (%p221) target = $region32
        $region31: #{tpu_custom_call.1} parent=11 // pred_region
          _
        $region32: #{tpu_custom_call.1} parent=11 // pred_fallthru
          _
        // Predicated region
        $region33: #{tpu_custom_call.1} parent=11 // pred_check
          %p224 = pneg %p168
        $region34: #{tpu_custom_call.1} parent=11 // pred_check_branch
          %226 = sbr.rel (%p224) target = $region36
        $region35: #{tpu_custom_call.1} parent=11 // pred_region
          _
        $region36: #{tpu_custom_call.1} parent=11 // pred_fallthru
          _
      $region12: #{tpu_custom_call.1} parent=5 // pred_fallthru
        _
      %p227 = scmp.lt.s32.totalorder %s16, 3
      // Predicated region
      $region37: #{tpu_custom_call.1} parent=5 // pred_check
        %p228 = pneg %p227
      $region38: #{tpu_custom_call.1} parent=5 // pred_check_branch
        %230 = sbr.rel (%p228) target = $region40
      $region39: #{tpu_custom_call.1} parent=5 // pred_region
        // Predicated region
        $region41: #{tpu_custom_call.1} parent=39 // pred_check
          %p231 = pneg %p36
        $region42: #{tpu_custom_call.1} parent=39 // pred_check_branch
          %233 = sbr.rel (%p231) target = $region44
        $region43: #{tpu_custom_call.1} parent=39 // pred_region
          %p234 = scmp.lt.s32.totalorder %s16, 2
          %s235 = scalar_select %p234, %s16, 2
          %s236 = smul.addr %s235, 4
          %s237 = scalar_lea.vmem %s0, %s236
        $region44: #{tpu_custom_call.1} parent=39 // pred_fallthru
          _
      $region40: #{tpu_custom_call.1} parent=5 // pred_fallthru
        _
      %p238 = scmp.le.s32.totalorder 1, %s16
      %p239 = scmp.lt.s32.totalorder %s16, 4
      %p240 = pnand %p238, %p239
      %p241 = pneg %p240
      // Predicated region
      $region45: #{tpu_custom_call.1} parent=5 // pred_check
        _
      $region46: #{tpu_custom_call.1} parent=5 // pred_check_branch
        %243 = sbr.rel (%p240) target = $region48
      $region47: #{tpu_custom_call.1} parent=5 // pred_region
        %s244 = ssub.s32 %s16, 1
        %p245 = scmp.lt.s32.totalorder %s21, 2
        %s246 = scalar_select %p245, %s21, 2
        %s247 = smul.addr %s246, 4
        %s248 = scalar_lea.vmem %s0, %s247
        %p249 = pneg %p42
        %p250 = pneg %p39
        %p251 = pneg %p63
        %p252 = pneg %p60
        %p253 = pneg %p84
        %p254 = pneg %p81
        %p255 = pneg %p105
        %p256 = pneg %p102
        %p257 = pneg %p126
        %p258 = pneg %p123
        %p259 = pneg %p147
        %p260 = pneg %p144
        %p261 = pneg %p168
        %p262 = pneg %p165
        %p263 = pneg %p194
        %p264 = pneg %p191
        %s265 = sand.u32 %s181, 1
        %s266 = scalar_lea.sflag [#allocation3], %s265
        %s267 = sand.u32 %s181, 1
        %s268 = smul.addr %s267, 8
        %s269 = scalar_lea.vmem [#allocation2], %s268
        %p270 = scmp.lt.s32.totalorder %s21, 2
        %s271 = scalar_select %p270, %s21, 2
        %s272 = smul.addr %s271, 4
        %s273 = scalar_lea.vmem %s0, %s272
        %v275 = vld [vmem:[%s273] sm:$0xf]
        %v276 = vld [vmem:[%s1] sm:$0xf]
        %v277 = vld [vmem:[%s1 + $0x4] sm:$0xf]
        %v278 = vld [vmem:[%s1 + $0x8] sm:$0xf]
        %v279 = vld [vmem:[%s1 + $0xc] sm:$0xf]
        %v280 = vld [vmem:[%s2] sm:$0x1]
        %v282 = vlaneseq
        %v283 = vshrl.u32 %v282, 7
        %v284 = vsub.s32 0, %v283
        %v285 = vrot.slane %v280, %v284
        %v291 = vunpack.c.l.b16 %v276
        %v292 = vunpack.c.l.b16 %v277
        %v293 = vunpack.c.l.b16 %v278
        %v294 = vunpack.c.l.b16 %v279
        %v295 = vpack.c.b16 %v292, %v291
        %v296 = vpack.c.b16 %v294, %v293
        %vm299 = vcmask 261120
        %v301 = vsel %vm299, %v275, 0
        %303 = vmatprep.subr.bf16.mxu0 0
        %304 = vmatpush1.bf16.msra.mxu0 %v295
        %305 = vmatprep.subr.bf16.mxu0 0
        %306 = vmatpush1.bf16.msra.mxu0 %v296
        %307 = vmatprep.subr.bf16.mxu0 0
        %308 = vmatpush1.bf16.msra.mxu0 0
        %309 = vmatprep.subr.bf16.mxu0 0
        %310 = vmatpush1.bf16.msra.mxu0 0
        %311 = vmatprep.subr.bf16.mxu0 0
        %312 = vmatpush1.bf16.msra.mxu0 0
        %313 = vmatprep.subr.bf16.mxu0 0
        %314 = vmatpush1.bf16.msra.mxu0 0
        %315 = vmatprep.subr.bf16.mxu0 0
        %316 = vmatpush1.bf16.msra.mxu0 0
        %317 = vmatprep.subr.bf16.mxu0 0
        %318 = vmatpush1.bf16.msra.mxu0 0
        %319 = vmatprep.subr.bf16.mxu0 0
        %320 = vmatpush1.bf16.msra.mxu0 0
        %321 = vmatprep.subr.bf16.mxu0 0
        %322 = vmatpush1.bf16.msra.mxu0 0
        %323 = vmatprep.subr.bf16.mxu0 0
        %324 = vmatpush1.bf16.msra.mxu0 0
        %325 = vmatprep.subr.bf16.mxu0 0
        %326 = vmatpush1.bf16.msra.mxu0 0
        %327 = vmatprep.subr.bf16.mxu0 0
        %328 = vmatpush1.bf16.msra.mxu0 0
        %329 = vmatprep.subr.bf16.mxu0 0
        %330 = vmatpush1.bf16.msra.mxu0 0
        %331 = vmatprep.subr.bf16.mxu0 0
        %332 = vmatpush1.bf16.msra.mxu0 0
        %333 = vmatprep.subr.bf16.mxu0 0
        %334 = vmatpush1.bf16.msra.mxu0 0
        %335 = vmatprep.mubr.bf16.mxu0 0
        %336 = vmatmul.mubr.bf16.gmra.mrb[0].mxu0 %v301
        %v337 = vpop.f32.mrb[0].mxu0
        %v338 = vadd.f32 %v285, %v337
        %v339 = vpop.f32.mrb[0].mxu0
        %v340 = vpop.f32.mrb[0].mxu0
        %v341 = vpop.f32.mrb[0].mxu0
        %342 = vdwg.mxu0
        %v343 = vmax.f32 %v338, 0.0
        %v344 = vpack.c.bf16 %v343, %v343
        %v345 = vld [vmem:[%s3] sm:$0xf]
        %v346 = vld [vmem:[%s3 + $0x4] sm:$0xf]
        %v347 = vld [vmem:[%s3 + $0x8] sm:$0xf]
        %v348 = vld [vmem:[%s3 + $0xc] sm:$0xf]
        %v349 = vld [vmem:[%s3 + $0x10] sm:$0xf]
        %v350 = vld [vmem:[%s3 + $0x14] sm:$0xf]
        %v351 = vld [vmem:[%s3 + $0x18] sm:$0xf]
        %v352 = vld [vmem:[%s3 + $0x1c] sm:$0xf]
        %v353 = vld [vmem:[%s3 + $0x20] sm:$0xf]
        %v354 = vld [vmem:[%s3 + $0x24] sm:$0xf]
        %v355 = vld [vmem:[%s3 + $0x28] sm:$0xf]
        %v356 = vld [vmem:[%s3 + $0x2c] sm:$0xf]
        %v357 = vld [vmem:[%s3 + $0x30] sm:$0xf]
        %v358 = vld [vmem:[%s3 + $0x34] sm:$0xf]
        %v359 = vld [vmem:[%s3 + $0x38] sm:$0xf]
        %v360 = vld [vmem:[%s3 + $0x3c] sm:$0xf]
        %v361 = vld [vmem:[%s4] sm:$0x1]
        %v363 = vlaneseq
        %v364 = vshrl.u32 %v363, 7
        %v365 = vsub.s32 0, %v364
        %v366 = vrot.slane %v361, %v365
        %v384 = vunpack.c.l.b16 %v345
        %v385 = vunpack.c.l.b16 %v346
        %v386 = vunpack.c.l.b16 %v347
        %v387 = vunpack.c.l.b16 %v348
        %v388 = vunpack.c.l.b16 %v349
        %v389 = vunpack.c.l.b16 %v350
        %v390 = vunpack.c.l.b16 %v351
        %v391 = vunpack.c.l.b16 %v352
        %v392 = vunpack.c.l.b16 %v353
        %v393 = vunpack.c.l.b16 %v354
        %v394 = vunpack.c.l.b16 %v355
        %v395 = vunpack.c.l.b16 %v356
        %v396 = vunpack.c.l.b16 %v357
        %v397 = vunpack.c.l.b16 %v358
        %v398 = vunpack.c.l.b16 %v359
        %v399 = vunpack.c.l.b16 %v360
        %v400 = vpack.c.b16 %v385, %v384
        %v401 = vpack.c.b16 %v387, %v386
        %v402 = vpack.c.b16 %v389, %v388
        %v403 = vpack.c.b16 %v391, %v390
        %v404 = vpack.c.b16 %v393, %v392
        %v405 = vpack.c.b16 %v395, %v394
        %v406 = vpack.c.b16 %v397, %v396
        %v407 = vpack.c.b16 %v399, %v398
        %416 = vmatprep.subr.bf16.mxu0 0
        %417 = vmatpush1.bf16.msra.mxu0 %v400
        %418 = vmatprep.subr.bf16.mxu0 0
        %419 = vmatpush1.bf16.msra.mxu0 %v401
        %420 = vmatprep.subr.bf16.mxu0 0
        %421 = vmatpush1.bf16.msra.mxu0 %v402
        %422 = vmatprep.subr.bf16.mxu0 0
        %423 = vmatpush1.bf16.msra.mxu0 %v403
        %424 = vmatprep.subr.bf16.mxu0 0
        %425 = vmatpush1.bf16.msra.mxu0 %v404
        %426 = vmatprep.subr.bf16.mxu0 0
        %427 = vmatpush1.bf16.msra.mxu0 %v405
        %428 = vmatprep.subr.bf16.mxu0 0
        %429 = vmatpush1.bf16.msra.mxu0 %v406
        %430 = vmatprep.subr.bf16.mxu0 0
        %431 = vmatpush1.bf16.msra.mxu0 %v407
        %432 = vmatprep.subr.bf16.mxu0 0
        %433 = vmatpush1.bf16.msra.mxu0 0
        %434 = vmatprep.subr.bf16.mxu0 0
        %435 = vmatpush1.bf16.msra.mxu0 0
        %436 = vmatprep.subr.bf16.mxu0 0
        %437 = vmatpush1.bf16.msra.mxu0 0
        %438 = vmatprep.subr.bf16.mxu0 0
        %439 = vmatpush1.bf16.msra.mxu0 0
        %440 = vmatprep.subr.bf16.mxu0 0
        %441 = vmatpush1.bf16.msra.mxu0 0
        %442 = vmatprep.subr.bf16.mxu0 0
        %443 = vmatpush1.bf16.msra.mxu0 0
        %444 = vmatprep.subr.bf16.mxu0 0
        %445 = vmatpush1.bf16.msra.mxu0 0
        %446 = vmatprep.subr.bf16.mxu0 0
        %447 = vmatpush1.bf16.msra.mxu0 0
        %448 = vmatprep.mubr.bf16.mxu0 0
        %449 = vmatmul.mubr.bf16.gmra.mrb[0].mxu0 %v344
        %v450 = vpop.f32.mrb[0].mxu0
        %v451 = vadd.f32 %v366, %v450
        %v452 = vpop.f32.mrb[0].mxu0
        %v453 = vpop.f32.mrb[0].mxu0
        %v454 = vpop.f32.mrb[0].mxu0
        %455 = vdwg.mxu0
        %v456 = vmax.f32 %v451, 0.0
        %v457 = vpack.c.bf16 %v456, %v456
        %v458 = vld [vmem:[%s5] sm:$0xf]
        %v459 = vld [vmem:[%s5 + $0x4] sm:$0xf]
        %v460 = vld [vmem:[%s5 + $0x8] sm:$0xf]
        %v461 = vld [vmem:[%s5 + $0xc] sm:$0xf]
        %v462 = vld [vmem:[%s5 + $0x10] sm:$0xf]
        %v463 = vld [vmem:[%s5 + $0x14] sm:$0xf]
        %v464 = vld [vmem:[%s5 + $0x18] sm:$0xf]
        %v465 = vld [vmem:[%s5 + $0x1c] sm:$0xf]
        %v466 = vld [vmem:[%s6] sm:$0x1]
        %v468 = vlaneseq
        %v469 = vshrl.u32 %v468, 7
        %v470 = vsub.s32 0, %v469
        %v471 = vrot.slane %v466, %v470
        %v481 = vunpack.c.l.b16 %v458
        %v482 = vunpack.c.l.b16 %v459
        %v483 = vunpack.c.l.b16 %v460
        %v484 = vunpack.c.l.b16 %v461
        %v485 = vunpack.c.l.b16 %v462
        %v486 = vunpack.c.l.b16 %v463
        %v487 = vunpack.c.l.b16 %v464
        %v488 = vunpack.c.l.b16 %v465
        %v489 = vpack.c.b16 %v482, %v481
        %v490 = vpack.c.b16 %v484, %v483
        %v491 = vpack.c.b16 %v486, %v485
        %v492 = vpack.c.b16 %v488, %v487
        %vm497 = vcmask 523264
        %v499 = vsel %vm497, %v457, 0
        %501 = vmatprep.subr.bf16.mxu0 0
        %502 = vmatpush1.bf16.msra.mxu0 %v489
        %503 = vmatprep.subr.bf16.mxu0 0
        %504 = vmatpush1.bf16.msra.mxu0 %v490
        %505 = vmatprep.subr.bf16.mxu0 0
        %506 = vmatpush1.bf16.msra.mxu0 %v491
        %507 = vmatprep.subr.bf16.mxu0 0
        %508 = vmatpush1.bf16.msra.mxu0 %v492
        %509 = vmatprep.subr.bf16.mxu0 0
        %510 = vmatpush1.bf16.msra.mxu0 0
        %511 = vmatprep.subr.bf16.mxu0 0
        %512 = vmatpush1.bf16.msra.mxu0 0
        %513 = vmatprep.subr.bf16.mxu0 0
        %514 = vmatpush1.bf16.msra.mxu0 0
        %515 = vmatprep.subr.bf16.mxu0 0
        %516 = vmatpush1.bf16.msra.mxu0 0
        %517 = vmatprep.subr.bf16.mxu0 0
        %518 = vmatpush1.bf16.msra.mxu0 0
        %519 = vmatprep.subr.bf16.mxu0 0
        %520 = vmatpush1.bf16.msra.mxu0 0
        %521 = vmatprep.subr.bf16.mxu0 0
        %522 = vmatpush1.bf16.msra.mxu0 0
        %523 = vmatprep.subr.bf16.mxu0 0
        %524 = vmatpush1.bf16.msra.mxu0 0
        %525 = vmatprep.subr.bf16.mxu0 0
        %526 = vmatpush1.bf16.msra.mxu0 0
        %527 = vmatprep.subr.bf16.mxu0 0
        %528 = vmatpush1.bf16.msra.mxu0 0
        %529 = vmatprep.subr.bf16.mxu0 0
        %530 = vmatpush1.bf16.msra.mxu0 0
        %531 = vmatprep.subr.bf16.mxu0 0
        %532 = vmatpush1.bf16.msra.mxu0 0
        %533 = vmatprep.mubr.bf16.mxu0 0
        %534 = vmatmul.mubr.bf16.gmra.mrb[0].mxu0 %v499
        %v535 = vpop.f32.mrb[0].mxu0
        %v536 = vadd.f32 %v471, %v535
        %v537 = vpop.f32.mrb[0].mxu0
        %v538 = vpop.f32.mrb[0].mxu0
        %v539 = vpop.f32.mrb[0].mxu0
        %540 = vdwg.mxu0
        %v541 = vxor.u32 %v536, 2147483648
        %v542 = vmul.f32 %v541, 1.442695
        %v543 = vpow.pop %v542
        %v544 = vadd.f32 %v543, 1.0
        %v545 = vrcp.pop %v544
        %v546 = vmul.f32 1.0, %v545
        %547 = vst [vmem:[%s269] sm:$0xff] %v546
        %s548 = sand.u32 %s181, 1
        %s549 = scalar_lea.sflag [#allocation3], %s548
        %s550 = sand.u32 %s181, 1
        %s551 = smul.addr %s550, 8
        %s552 = scalar_lea.vmem [#allocation2], %s551
        // Predicated region
        $region49: #{tpu_custom_call.1} parent=47 // pred_check
          %p553 = pneg %p191
        $region50: #{tpu_custom_call.1} parent=47 // pred_check_branch
          %555 = sbr.rel (%p553) target = $region52
        $region51: #{tpu_custom_call.1} parent=47 // pred_region
          %s557 = ssub.s32 128, 128
          %558 = vsyncadd %s549, %s557
          %s559 = smul.addr %s21, 128
          %s560 = scalar_lea.hbm %s7, %s559
          %s562 = sshll.u32 %s552, 4
          %s563 = int_to_ptr.vmem [resolvable:$true] %s562
          %565 = dma.vmem_to_hbm [thread:$0]  %s563, 128, %s560, %s549
        $region52: #{tpu_custom_call.1} parent=47 // pred_fallthru
          _
      $region48: #{tpu_custom_call.1} parent=5 // pred_fallthru
        _
      %p566 = scmp.le.s32.totalorder 2, %s16
      // Predicated region
      $region53: #{tpu_custom_call.1} parent=5 // pred_check
        %p567 = pneg %p566
      $region54: #{tpu_custom_call.1} parent=5 // pred_check_branch
        %569 = sbr.rel (%p567) target = $region56
      $region55: #{tpu_custom_call.1} parent=5 // pred_region
        %s570 = ssub.s32 %s16, 2
        // Predicated region
        $region57: #{tpu_custom_call.1} parent=55 // pred_check
          %p571 = pneg %p197
        $region58: #{tpu_custom_call.1} parent=55 // pred_check_branch
          %573 = sbr.rel (%p571) target = $region60
        $region59: #{tpu_custom_call.1} parent=55 // pred_region
          %s574 = sand.u32 %s182, 1
          %s575 = scalar_lea.sflag [#allocation3], %s574
          %s576 = sand.u32 %s182, 1
          %s577 = smul.addr %s576, 8
          %s578 = scalar_lea.vmem [#allocation2], %s577
          %579 = dma.done %s575, 128
        $region60: #{tpu_custom_call.1} parent=55 // pred_fallthru
          _
      $region56: #{tpu_custom_call.1} parent=5 // pred_fallthru
        _
    $region6: #{tpu_custom_call.1} parent=1 // loop_footer
      %s20 = sadd.s32 1, %s16
    $region7: #{tpu_custom_call.1} parent=1 // loop_footer_branch
      %15 = sbr.rel target = $region3
    $region8: #{tpu_custom_call.1} parent=1 // loop_exit
      _
    %580 = vsyncpa [#allocation3], 1
    %s581 = scalar_lea.sflag [#allocation3], 1
    %582 = vsyncpa %s581, 1

</llo_original>
